<compile_context>
chip_gen: v5e
topology: v5e:2x2
jax: 0.10.0
libtpu: 0.0.40
codegen_flags: <defaults>
</compile_context>

<pallas_src>
import numpy as np
import jax
import jax.numpy as jnp
from jax.experimental import pallas as pl
from jax.experimental.pallas import tpu as pltpu


# ----------------------------------------------------------------------------
# Fused loss kernel: weighted CE + cardinality + L1 + GIoU, all layers stacked.
# Grid = (L, B).  Output block [1, 8, 128] per layer:
#   row 0, lane 0: sum_q w[t]*(lse - logit_t)   (CE numerator)
#   row 0, lane 1: sum_q w[t]                   (CE denominator)
#   row 0, lane 2: sum_b |card_pred_b - len_b|  (cardinality, pre-mean)
#   row 0, lane 3: sum over matched boxes of L1
#   row 0, lane 4: sum over matched boxes of (1 - GIoU)
# ----------------------------------------------------------------------------
def _fused_detr_loss_kernel(tlen_sref, logits_ref, tclass_ref, w_ref,
                            src_ref, tgt_ref, out_ref):
    b = pl.program_id(1)

    @pl.when(b == 0)
    def _init():
        out_ref[...] = jnp.zeros_like(out_ref)

    # ---- weighted cross entropy + cardinality for this (layer, batch) tile --
    logits = logits_ref[0, 0]                               # [Q, K] f32
    tgt = tclass_ref[0, 0]                                  # [Q, 1] i32
    q, k = logits.shape
    col = jax.lax.broadcasted_iota(jnp.int32, (q, k), 1)
    onehot = (col == tgt).astype(jnp.float32)               # [Q, K]

    m = jnp.max(logits, axis=-1, keepdims=True)             # [Q, 1]
    lse = m + jnp.log(jnp.sum(jnp.exp(logits - m), axis=-1, keepdims=True))
    wsel = onehot * w_ref[...]                               # weight at target
    ce_num = jnp.sum(wsel * (lse - logits), keepdims=True)   # (1, 1)
    ce_den = jnp.sum(wsel, keepdims=True)                    # (1, 1)

    neg_inf = jnp.float32(-1e30)
    rest_max = jnp.max(jnp.where(col < k - 1, logits, neg_inf),
                       axis=-1, keepdims=True)               # best non-"no-object"
    last = jnp.sum(jnp.where(col == k - 1, logits, 0.0),
                   axis=-1, keepdims=True)                   # "no-object" logit
    # argmax(-1) != K-1  <=>  max of first K-1 logits >= last logit
    card_pred = jnp.sum((rest_max >= last).astype(jnp.float32), keepdims=True)
    tlen = tlen_sref[b].astype(jnp.float32)
    card_err = jnp.abs(card_pred - tlen)                     # (1, 1)

    row = jax.lax.broadcasted_iota(jnp.int32, (8, 128), 0)
    lane = jax.lax.broadcasted_iota(jnp.int32, (8, 128), 1)

    def _slot(j):
        return ((row == 0) & (lane == j)).astype(jnp.float32)

    out_ref[0, :, :] += (_slot(0) * ce_num + _slot(1) * ce_den
                         + _slot(2) * card_err)

    # ---- L1 + GIoU box losses: per-layer, computed once (batch step 0) ------
    @pl.when(b == 0)
    def _boxes():
        s = src_ref[0]                                       # [8, M_pad]
        t = tgt_ref[0]
        scx, scy, sw, sh = s[0:1, :], s[1:2, :], s[2:3, :], s[3:4, :]
        mask = s[4:5, :]                                     # 1 = real matched box
        tcx, tcy, tw, th = t[0:1, :], t[1:2, :], t[2:3, :], t[3:4, :]

        l1 = jnp.sum(mask * (jnp.abs(scx - tcx) + jnp.abs(scy - tcy)
                             + jnp.abs(sw - tw) + jnp.abs(sh - th)),
                     keepdims=True)                          # (1, 1)

        sx0, sy0 = scx - 0.5 * sw, scy - 0.5 * sh
        sx1, sy1 = scx + 0.5 * sw, scy + 0.5 * sh
        tx0, ty0 = tcx - 0.5 * tw, tcy - 0.5 * th
        tx1, ty1 = tcx + 0.5 * tw, tcy + 0.5 * th
        area_s = (sx1 - sx0) * (sy1 - sy0)
        area_t = (tx1 - tx0) * (ty1 - ty0)
        inter = (jnp.clip(jnp.minimum(sx1, tx1) - jnp.maximum(sx0, tx0), 0.0) *
                 jnp.clip(jnp.minimum(sy1, ty1) - jnp.maximum(sy0, ty0), 0.0))
        union = area_s + area_t - inter
        iou = inter / union
        area_e = (jnp.clip(jnp.maximum(sx1, tx1) - jnp.minimum(sx0, tx0), 0.0) *
                  jnp.clip(jnp.maximum(sy1, ty1) - jnp.minimum(sy0, ty0), 0.0))
        giou = iou - (area_e - union) / area_e
        giou_sum = jnp.sum(mask * (1.0 - giou), keepdims=True)   # (1, 1)

        out_ref[0, :, :] += _slot(3) * l1 + _slot(4) * giou_sum


def _fused_losses_call(tlens, logits, tclass, weight, src_boxes, tgt_boxes):
    L, B, Q, K = logits.shape
    m_pad = src_boxes.shape[-1]
    return pl.pallas_call(
        _fused_detr_loss_kernel,
        out_shape=jax.ShapeDtypeStruct((L, 8, 128), jnp.float32),
        grid_spec=pltpu.PrefetchScalarGridSpec(
            num_scalar_prefetch=1,
            grid=(L, B),
            in_specs=[
                pl.BlockSpec((1, 1, Q, K), lambda l, b, tl: (l, b, 0, 0)),
                pl.BlockSpec((1, 1, Q, 1), lambda l, b, tl: (l, b, 0, 0)),
                pl.BlockSpec((1, K), lambda l, b, tl: (0, 0)),
                pl.BlockSpec((1, 8, m_pad), lambda l, b, tl: (l, 0, 0)),
                pl.BlockSpec((1, 8, m_pad), lambda l, b, tl: (l, 0, 0)),
            ],
            out_specs=pl.BlockSpec((1, 8, 128), lambda l, b, tl: (l, 0, 0)),
        ),
        compiler_params=pltpu.CompilerParams(
            dimension_semantics=("parallel", "arbitrary")),
    )(tlens, logits, tclass, weight, src_boxes, tgt_boxes)


# ----------------------------------------------------------------------------
# DetrLoss (Pallas-backed)
# ----------------------------------------------------------------------------
class DetrLossPallas:
    def __init__(self, matcher, num_classes, eos_coef, losses):
        self.matcher = matcher
        self.num_classes = num_classes
        self.eos_coef = eos_coef
        self.losses = losses
        if num_classes == 3:
            ew = jnp.array([7.4, 1.4, 4.3, 1.0], dtype=jnp.float32)
        else:
            ew = jnp.ones(num_classes + 1, dtype=jnp.float32)
        self.empty_weight = ew.at[-1].set(jnp.float32(eos_coef))

    # --- host-side index plumbing (matcher output is host data) -------------
    @staticmethod
    def _get_source_permutation_idx(indices):
        batch_idx = np.concatenate(
            [np.full_like(np.asarray(src), i) for i, (src, _) in enumerate(indices)])
        source_idx = np.concatenate([np.asarray(src) for src, _ in indices])
        return batch_idx, source_idx

    # --- per-layer device tensors -------------------------------------------
    @staticmethod
    def _pack_boxes(boxes_m4, m_pad, with_mask):
        m = boxes_m4.shape[0]
        # benign identical pad box -> exactly zero L1 / zero (1 - GIoU) contribution
        coords = jnp.full((4, m_pad), 0.5, dtype=jnp.float32)
        if m:
            coords = coords.at[:, :m].set(boxes_m4.T)
        packed = jnp.zeros((8, m_pad), jnp.float32).at[0:4, :].set(coords)
        if with_mask and m:
            packed = packed.at[4, :m].set(1.0)
        return packed

    def _layer_arrays(self, layer_outputs, targets, indices, m_pad):
        logits = layer_outputs.get('logits')
        pred_boxes = layer_outputs.get('pred_boxes')
        if logits is None:
            B, Q = pred_boxes.shape[:2]
            logits = jnp.zeros((B, Q, self.num_classes + 1), jnp.float32)
        else:
            logits = jnp.asarray(logits, jnp.float32)
        B, Q, K = logits.shape

        bidx, sidx = self._get_source_permutation_idx(indices)
        tco_list = [np.asarray(t['class_labels'])[np.asarray(J)]
                    for t, (_, J) in zip(targets, indices)]
        tco = (np.concatenate(tco_list).astype(np.int32)
               if len(tco_list) else np.zeros((0,), np.int32))

        # target classes built on device with a scatter (only tiny index arrays
        # travel host->device; model outputs never round-trip to the host).
        target_classes = jnp.full((B, Q), self.num_classes, dtype=jnp.int32)
        if bidx.size:
            target_classes = target_classes.at[
                jnp.asarray(bidx, jnp.int32), jnp.asarray(sidx, jnp.int32)
            ].set(jnp.asarray(tco, jnp.int32))
        target_classes = target_classes.reshape(B, Q, 1)

        # matched predicted boxes gathered on device
        if pred_boxes is not None and bidx.size:
            src = jnp.asarray(pred_boxes, jnp.float32)[
                jnp.asarray(bidx, jnp.int32), jnp.asarray(sidx, jnp.int32)]
        else:
            src = jnp.zeros((0, 4), jnp.float32)

        tgt_list = [np.asarray(t['boxes'])[np.asarray(i)]
                    for t, (_, i) in zip(targets, indices)]
        total_t = sum(int(x.shape[0]) for x in tgt_list) if tgt_list else 0
        tgt_np = (np.concatenate(tgt_list, axis=0).astype(np.float32)
                  if total_t else np.zeros((0, 4), np.float32))
        tgt = jnp.asarray(tgt_np, jnp.float32)

        src_pack = self._pack_boxes(src, m_pad, with_mask=True)
        tgt_pack = self._pack_boxes(tgt, m_pad, with_mask=False)
        return logits, target_classes, src_pack, tgt_pack

    # --- single fused kernel call over all layers ----------------------------
    def _run_layers(self, layer_outputs_list, targets, layer_indices, num_boxes):
        B = len(targets)
        m_max = max(sum(int(np.asarray(s).shape[0]) for s, _ in idx)
                    for idx in layer_indices)
        m_pad = ((max(m_max, 1) + 127) // 128) * 128         # lane-aligned

        packed = [self._layer_arrays(lo, targets, idx, m_pad)
                  for lo, idx in zip(layer_outputs_list, layer_indices)]
        logits = jnp.stack([p[0] for p in packed])           # [L, B, Q, K]
        tclass = jnp.stack([p[1] for p in packed])           # [L, B, Q, 1]
        src = jnp.stack([p[2] for p in packed])              # [L, 8, m_pad]
        tgt = jnp.stack([p[3] for p in packed])              # [L, 8, m_pad]
        weight = self.empty_weight.reshape(1, -1)            # [1, K]
        tlens = jnp.asarray([len(t['class_labels']) for t in targets], jnp.int32)

        raw = _fused_losses_call(tlens, logits, tclass, weight, src, tgt)
        vals = raw[:, 0, :]                                  # [L, 128]
        loss_ce = vals[:, 0] / vals[:, 1]
        card = vals[:, 2] / jnp.float32(B)
        loss_bbox = vals[:, 3] / jnp.float32(num_boxes)
        loss_giou = vals[:, 4] / jnp.float32(num_boxes)
        return [{'loss_ce': loss_ce[l], 'cardinality_error': card[l],
                 'loss_bbox': loss_bbox[l], 'loss_giou': loss_giou[l]}
                for l in range(len(layer_outputs_list))]

    def _select(self, full):
        sel = {}
        if 'labels' in self.losses:
            sel['loss_ce'] = full['loss_ce']
        if 'cardinality' in self.losses:
            sel['cardinality_error'] = full['cardinality_error']
        if 'boxes' in self.losses:
            sel['loss_bbox'] = full['loss_bbox']
            sel['loss_giou'] = full['loss_giou']
        return sel

    # --- public per-loss API (kept for parity with the torch module) --------
    def loss_labels(self, outputs, targets, indices, num_boxes):
        if 'logits' not in outputs:
            raise KeyError('No logits were found in the outputs')
        full = self._run_layers([outputs], targets, [indices], num_boxes)[0]
        return {'loss_ce': full['loss_ce']}

    def loss_cardinality(self, outputs, targets, indices, num_boxes):
        full = self._run_layers([outputs], targets, [indices], num_boxes)[0]
        return {'cardinality_error': full['cardinality_error']}

    def loss_boxes(self, outputs, targets, indices, num_boxes):
        if 'pred_boxes' not in outputs:
            raise KeyError('No predicted boxes found in outputs')
        full = self._run_layers([outputs], targets, [indices], num_boxes)[0]
        return {'loss_bbox': full['loss_bbox'], 'loss_giou': full['loss_giou']}

    def loss_masks(self, outputs, targets, indices, num_boxes):
        # TODO(synk): loss_masks needs bilinear interpolation + nested-tensor padding; no clean Pallas equivalent here.
        raise NotImplementedError('loss_masks is not implemented in the Pallas port')

    def get_loss(self, loss, outputs, targets, indices, num_boxes):
        loss_map = {'labels': self.loss_labels,
                    'cardinality': self.loss_cardinality,
                    'boxes': self.loss_boxes,
                    'masks': self.loss_masks}
        if loss not in loss_map:
            raise ValueError(f'Loss {loss} not supported')
        return loss_map[loss](outputs, targets, indices, num_boxes)

    def forward(self, outputs, targets):
        outputs_without_aux = {k: v for k, v in outputs.items()
                               if k != 'auxiliary_outputs'}
        indices = self.matcher(outputs_without_aux, targets)
        num_boxes = sum(len(t['class_labels']) for t in targets)
        num_boxes = float(max(num_boxes, 1))   # world_size == 1 (no accelerate)

        if 'masks' in self.losses:
            # TODO(synk): masks loss (sigmoid focal + dice) not ported to Pallas.
            raise NotImplementedError('masks loss is not supported in the Pallas port')

        layer_outputs = [outputs_without_aux]
        layer_indices = [indices]
        if 'auxiliary_outputs' in outputs:
            for aux in outputs['auxiliary_outputs']:
                layer_outputs.append(aux)
                layer_indices.append(self.matcher(aux, targets))

        per_layer = self._run_layers(layer_outputs, targets, layer_indices, num_boxes)

        losses = {}
        losses.update(self._select(per_layer[0]))
        for i, full in enumerate(per_layer[1:]):
            losses.update({k + f'_{i}': v for k, v in self._select(full).items()})
        return losses


def simple_matcher(outputs, targets):
    # TODO(synk): Hungarian assignment (scipy linear_sum_assignment) has no Pallas/JAX equivalent; using a fixed deterministic query<->target matching.
    indices = []
    for t in targets:
        n = len(t['class_labels'])
        indices.append((np.arange(n, dtype=np.int64), np.arange(n, dtype=np.int64)))
    return indices


# ----------------------------------------------------------------------------
# Pure-JAX reference (silent correctness check of the fused kernel)
# ----------------------------------------------------------------------------
def _reference_losses(outputs, targets, indices, empty_weight, num_classes, num_boxes):
    logits = jnp.asarray(outputs['logits'], jnp.float32)
    B, Q, K = logits.shape
    bidx = np.concatenate([np.full_like(np.asarray(s), i)
                           for i, (s, _) in enumerate(indices)])
    sidx = np.concatenate([np.asarray(s) for s, _ in indices])
    tco = np.concatenate([np.asarray(t['class_labels'])[np.asarray(J)]
                          for t, (_, J) in zip(targets, indices)])
    tc = np.full((B, Q), num_classes, dtype=np.int32)
    tc[bidx, sidx] = tco
    tc = jnp.asarray(tc)
    logp = jax.nn.log_softmax(logits, axis=-1).reshape(B * Q, K)
    picked = jnp.take_along_axis(logp, tc.reshape(-1, 1), axis=1)[:, 0]
    w = empty_weight[tc.reshape(-1)]
    loss_ce = -(w * picked).sum() / w.sum()

    tlen = jnp.asarray([float(len(t['class_labels'])) for t in targets])
    card_pred = (jnp.argmax(logits, -1) != K - 1).sum(1).astype(jnp.float32)
    card_err = jnp.abs(card_pred - tlen).mean()

    src = jnp.asarray(np.asarray(outputs['pred_boxes'])[bidx, sidx], jnp.float32)
    tgt = jnp.asarray(np.concatenate(
        [np.asarray(t['boxes'])[np.asarray(i)] for t, (_, i) in zip(targets, indices)],
        axis=0), jnp.float32)
    loss_bbox = jnp.abs(src - tgt).sum() / num_boxes

    def corners(b):
        cx, cy, w_, h_ = b[:, 0], b[:, 1], b[:, 2], b[:, 3]
        return cx - 0.5 * w_, cy - 0.5 * h_, cx + 0.5 * w_, cy + 0.5 * h_

    sx0, sy0, sx1, sy1 = corners(src)
    tx0, ty0, tx1, ty1 = corners(tgt)
    area_s = (sx1 - sx0) * (sy1 - sy0)
    area_t = (tx1 - tx0) * (ty1 - ty0)
    inter = (jnp.clip(jnp.minimum(sx1, tx1) - jnp.maximum(sx0, tx0), 0.0) *
             jnp.clip(jnp.minimum(sy1, ty1) - jnp.maximum(sy0, ty0), 0.0))
    union = area_s + area_t - inter
    iou = inter / union
    area_e = (jnp.clip(jnp.maximum(sx1, tx1) - jnp.minimum(sx0, tx0), 0.0) *
              jnp.clip(jnp.maximum(sy1, ty1) - jnp.minimum(sy0, ty0), 0.0))
    giou = iou - (area_e - union) / area_e
    loss_giou = (1.0 - giou).sum() / num_boxes
    return {'loss_ce': loss_ce, 'cardinality_error': card_err,
            'loss_bbox': loss_bbox, 'loss_giou': loss_giou}


if __name__ == "__main__":
    key = jax.random.PRNGKey(0)
    B, Q, C = 2, 8, 3          # batch, queries, num_classes
    K = C + 1
    NT = 3                     # targets per image
    L_AUX = 2                  # auxiliary decoder layers

    def rand_outputs(k):
        k1, k2 = jax.random.split(k)
        return {'logits': jax.random.normal(k1, (B, Q, K), dtype=jnp.float32),
                'pred_boxes': jax.random.uniform(k2, (B, Q, 4), dtype=jnp.float32,
                                                 minval=0.1, maxval=0.5)}

    key, k_main, k_tgt = jax.random.split(key, 3)
    outputs = rand_outputs(k_main)
    aux_outputs = []
    for _ in range(L_AUX):
        key, ka = jax.random.split(key)
        aux_outputs.append(rand_outputs(ka))
    outputs['auxiliary_outputs'] = aux_outputs

    targets = []
    kt = k_tgt
    for b in range(B):
        ka, kb, kt = jax.random.split(kt, 3)
        labels = np.asarray(jax.random.randint(ka, (NT,), 0, C), dtype=np.int32)
        boxes = np.asarray(jax.random.uniform(kb, (NT, 4), dtype=jnp.float32,
                                              minval=0.1, maxval=0.5))
        targets.append({'class_labels': labels, 'boxes': boxes})

    criterion = DetrLossPallas(simple_matcher, num_classes=C, eos_coef=0.1,
                               losses=['labels', 'cardinality', 'boxes'])
    losses = criterion.forward(outputs, targets)
    jax.block_until_ready(list(losses.values()))

    # silent correctness check vs pure-JAX reference (main + every aux layer)
    num_boxes = float(max(sum(len(t['class_labels']) for t in targets), 1))
    layer_outs = [{k: v for k, v in outputs.items() if k != 'auxiliary_outputs'}]
    layer_outs += aux_outputs
    for li, lo in enumerate(layer_outs):
        indices = simple_matcher(lo, targets)
        ref = _reference_losses(lo, targets, indices, criterion.empty_weight,
                                C, num_boxes)
        suffix = '' if li == 0 else f'_{li - 1}'
        for name, val in ref.items():
            np.testing.assert_allclose(np.asarray(losses[name + suffix]),
                                       np.asarray(val), rtol=1e-5, atol=1e-5)

    print("KERNEL_OK")
</pallas_src>

<mosaic_0001>
module attributes {stable_mosaic.version = 11 : i64} {
  func.func @_fused_detr_loss_kernel(%arg0: i32, %arg1: i32, %arg2: memref<2xi32, #tpu.memory_space<smem>>, %arg3: memref<1x1x8x4xf32, #tpu.memory_space<vmem>>, %arg4: memref<1x1x8x1xi32, #tpu.memory_space<vmem>>, %arg5: memref<1x4xf32, #tpu.memory_space<vmem>>, %arg6: memref<1x8x128xf32, #tpu.memory_space<vmem>>, %arg7: memref<1x8x128xf32, #tpu.memory_space<vmem>>, %arg8: memref<1x8x128xf32, #tpu.memory_space<vmem>>) attributes {dimension_semantics = [#tpu.dimension_semantics<parallel>, #tpu.dimension_semantics<arbitrary>], iteration_bounds = array<i64: 3, 2>, scalar_prefetch = 1 : i64, scratch_operands = 0 : i64, tpu.core_type = #tpu.core_type<tc>, window_params = [{transform_indices = @transform_0, window_bounds = array<i64: 1, 1, 8, 4>}, {transform_indices = @transform_1, window_bounds = array<i64: 1, 1, 8, 1>}, {pipeline_mode = #tpu.pipeline_mode<synchronous>, transform_indices = @transform_2, window_bounds = array<i64: 1, 4>}, {transform_indices = @transform_3, window_bounds = array<i64: 1, 8, 128>}, {transform_indices = @transform_4, window_bounds = array<i64: 1, 8, 128>}, {transform_indices = @transform_5, window_bounds = array<i64: 1, 8, 128>}]} {
    %c0_i32 = arith.constant 0 : i32
    %0 = arith.cmpi eq, %arg1, %c0_i32 : i32
    %1 = arith.extui %0 : i1 to i32
    %c0_i32_0 = arith.constant 0 : i32
    %2 = arith.cmpi ne, %1, %c0_i32_0 : i32
    scf.if %2 {
      %cst_31 = arith.constant 0.000000e+00 : f32
      %103 = vector.broadcast %cst_31 : f32 to vector<1x8x128xf32>
      %c0_32 = arith.constant 0 : index
      %c0_33 = arith.constant 0 : index
      %c0_34 = arith.constant 0 : index
      %104 = vector.load %arg8[%c0_32, %c0_33, %c0_34] : memref<1x8x128xf32, #tpu.memory_space<vmem>>, vector<1x8x128xf32>
      tpu.vector_store %arg8[%c0_32, %c0_33, %c0_34], %103 {strides = array<i32>} : memref<1x8x128xf32, #tpu.memory_space<vmem>>, vector<1x8x128xf32>,
    } else {
    }
    %c0 = arith.constant 0 : index
    %c0_1 = arith.constant 0 : index
    %c0_2 = arith.constant 0 : index
    %c0_3 = arith.constant 0 : index
    %3 = vector.load %arg3[%c0, %c0_1, %c0_2, %c0_3] : memref<1x1x8x4xf32, #tpu.memory_space<vmem>>, vector<1x1x8x4xf32>
    %4 = vector.shape_cast %3 : vector<1x1x8x4xf32> to vector<8x4xf32>
    %c0_4 = arith.constant 0 : index
    %c0_5 = arith.constant 0 : index
    %c0_6 = arith.constant 0 : index
    %c0_7 = arith.constant 0 : index
    %5 = vector.load %arg4[%c0_4, %c0_5, %c0_6, %c0_7] : memref<1x1x8x1xi32, #tpu.memory_space<vmem>>, vector<1x1x8x1xi32>
    %6 = vector.shape_cast %5 : vector<1x1x8x1xi32> to vector<8x1xi32>
    %7 = tpu.iota {dimensions = array<i32: 1>} : vector<8x4xi32>
    %8 = vector.broadcast %6 : vector<8x1xi32> to vector<8x4xi32>
    %9 = arith.cmpi eq, %7, %8 : vector<8x4xi32>
    %10 = arith.extui %9 : vector<8x4xi1> to vector<8x4xi32>
    %11 = arith.sitofp %10 : vector<8x4xi32> to vector<8x4xf32>
    %cst = arith.constant dense<0xFF800000> : vector<8xf32>
    %12 = vector.multi_reduction <maximumf>, %4, %cst [1] : vector<8x4xf32> to vector<8xf32>
    %13 = vector.shape_cast %12 : vector<8xf32> to vector<8x1xf32>
    %14 = vector.broadcast %13 : vector<8x1xf32> to vector<8x4xf32>
    %15 = arith.subf %4, %14 : vector<8x4xf32>
    %16 = math.exp %15 : vector<8x4xf32>
    %cst_8 = arith.constant dense<0.000000e+00> : vector<8xf32>
    %17 = vector.multi_reduction <add>, %16, %cst_8 [1] : vector<8x4xf32> to vector<8xf32>
    %18 = vector.shape_cast %17 : vector<8xf32> to vector<8x1xf32>
    %19 = math.log %18 : vector<8x1xf32>
    %20 = arith.addf %13, %19 : vector<8x1xf32>
    %c0_9 = arith.constant 0 : index
    %c0_10 = arith.constant 0 : index
    %21 = vector.load %arg5[%c0_9, %c0_10] : memref<1x4xf32, #tpu.memory_space<vmem>>, vector<1x4xf32>
    %22 = vector.broadcast %21 : vector<1x4xf32> to vector<8x4xf32>
    %23 = arith.mulf %11, %22 : vector<8x4xf32>
    %24 = vector.broadcast %20 : vector<8x1xf32> to vector<8x4xf32>
    %25 = arith.subf %24, %4 : vector<8x4xf32>
    %26 = arith.mulf %23, %25 : vector<8x4xf32>
    %27 = vector.shape_cast %26 : vector<8x4xf32> to vector<1x8x4xf32>
    %cst_11 = arith.constant dense<0.000000e+00> : vector<1xf32>
    %28 = vector.multi_reduction <add>, %27, %cst_11 [1, 2] : vector<1x8x4xf32> to vector<1xf32>
    %29 = vector.shape_cast %28 : vector<1xf32> to vector<1x1x1xf32>
    %30 = vector.extract %29[0, 0, 0] : f32 from vector<1x1x1xf32>
    %31 = vector.broadcast %30 : f32 to vector<1x1xf32>
    %32 = vector.shape_cast %23 : vector<8x4xf32> to vector<1x8x4xf32>
    %cst_12 = arith.constant dense<0.000000e+00> : vector<1xf32>
    %33 = vector.multi_reduction <add>, %32, %cst_12 [1, 2] : vector<1x8x4xf32> to vector<1xf32>
    %34 = vector.shape_cast %33 : vector<1xf32> to vector<1x1x1xf32>
    %35 = vector.extract %34[0, 0, 0] : f32 from vector<1x1x1xf32>
    %36 = vector.broadcast %35 : f32 to vector<1x1xf32>
    %c3_i32 = arith.constant 3 : i32
    %37 = vector.broadcast %c3_i32 : i32 to vector<8x4xi32>
    %38 = arith.cmpi slt, %7, %37 : vector<8x4xi32>
    %cst_13 = arith.constant -1.000000e+30 : f32
    %39 = vector.broadcast %cst_13 : f32 to vector<8x4xf32>
    %40 = arith.select %38, %4, %39 : vector<8x4xi1>, vector<8x4xf32>
    %cst_14 = arith.constant dense<0xFF800000> : vector<8xf32>
    %41 = vector.multi_reduction <maximumf>, %40, %cst_14 [1] : vector<8x4xf32> to vector<8xf32>
    %42 = vector.shape_cast %41 : vector<8xf32> to vector<8x1xf32>
    %c3_i32_15 = arith.constant 3 : i32
    %43 = vector.broadcast %c3_i32_15 : i32 to vector<8x4xi32>
    %44 = arith.cmpi eq, %7, %43 : vector<8x4xi32>
    %cst_16 = arith.constant 0.000000e+00 : f32
    %45 = vector.broadcast %cst_16 : f32 to vector<8x4xf32>
    %46 = arith.select %44, %4, %45 : vector<8x4xi1>, vector<8x4xf32>
    %cst_17 = arith.constant dense<0.000000e+00> : vector<8xf32>
    %47 = vector.multi_reduction <add>, %46, %cst_17 [1] : vector<8x4xf32> to vector<8xf32>
    %48 = vector.shape_cast %47 : vector<8xf32> to vector<8x1xf32>
    %49 = arith.cmpf oge, %42, %48 : vector<8x1xf32>
    %50 = arith.extui %49 : vector<8x1xi1> to vector<8x1xi32>
    %51 = arith.sitofp %50 : vector<8x1xi32> to vector<8x1xf32>
    %52 = vector.shape_cast %51 : vector<8x1xf32> to vector<1x8x1xf32>
    %cst_18 = arith.constant dense<0.000000e+00> : vector<1xf32>
    %53 = vector.multi_reduction <add>, %52, %cst_18 [1, 2] : vector<1x8x1xf32> to vector<1xf32>
    %54 = vector.shape_cast %53 : vector<1xf32> to vector<1x1x1xf32>
    %55 = vector.extract %54[0, 0, 0] : f32 from vector<1x1x1xf32>
    %56 = vector.broadcast %55 : f32 to vector<1x1xf32>
    %57 = arith.index_cast %arg1 : i32 to index
    %58 = memref.load %arg2[%57] : memref<2xi32, #tpu.memory_space<smem>>
    %59 = arith.sitofp %58 : i32 to f32
    %60 = vector.broadcast %59 : f32 to vector<1x1xf32>
    %61 = arith.subf %56, %60 : vector<1x1xf32>
    %62 = math.absf %61 : vector<1x1xf32>
    %63 = tpu.iota {dimensions = array<i32: 0>} : vector<8x128xi32>
    %64 = tpu.iota {dimensions = array<i32: 1>} : vector<8x128xi32>
    %c0_19 = arith.constant 0 : index
    %c0_20 = arith.constant 0 : index
    %c0_21 = arith.constant 0 : index
    %65 = vector.load %arg8[%c0_19, %c0_20, %c0_21] : memref<1x8x128xf32, #tpu.memory_space<vmem>>, vector<1x8x128xf32>
    %66 = vector.shape_cast %65 : vector<1x8x128xf32> to vector<8x128xf32>
    %c0_i32_22 = arith.constant 0 : i32
    %67 = vector.broadcast %c0_i32_22 : i32 to vector<8x128xi32>
    %68 = arith.cmpi eq, %63, %67 : vector<8x128xi32>
    %c0_i32_23 = arith.constant 0 : i32
    %69 = vector.broadcast %c0_i32_23 : i32 to vector<8x128xi32>
    %70 = arith.cmpi eq, %64, %69 : vector<8x128xi32>
    %71 = arith.andi %68, %70 : vector<8x128xi1>
    %72 = arith.extui %71 : vector<8x128xi1> to vector<8x128xi32>
    %73 = arith.sitofp %72 : vector<8x128xi32> to vector<8x128xf32>
    %74 = vector.broadcast %31 : vector<1x1xf32> to vector<8x128xf32>
    %75 = arith.mulf %73, %74 : vector<8x128xf32>
    %c0_i32_24 = arith.constant 0 : i32
    %76 = vector.broadcast %c0_i32_24 : i32 to vector<8x128xi32>
    %77 = arith.cmpi eq, %63, %76 : vector<8x128xi32>
    %c1_i32 = arith.constant 1 : i32
    %78 = vector.broadcast %c1_i32 : i32 to vector<8x128xi32>
    %79 = arith.cmpi eq, %64, %78 : vector<8x128xi32>
    %80 = arith.andi %77, %79 : vector<8x128xi1>
    %81 = arith.extui %80 : vector<8x128xi1> to vector<8x128xi32>
    %82 = arith.sitofp %81 : vector<8x128xi32> to vector<8x128xf32>
    %83 = vector.broadcast %36 : vector<1x1xf32> to vector<8x128xf32>
    %84 = arith.mulf %82, %83 : vector<8x128xf32>
    %85 = arith.addf %75, %84 : vector<8x128xf32>
    %c0_i32_25 = arith.constant 0 : i32
    %86 = vector.broadcast %c0_i32_25 : i32 to vector<8x128xi32>
    %87 = arith.cmpi eq, %63, %86 : vector<8x128xi32>
    %c2_i32 = arith.constant 2 : i32
    %88 = vector.broadcast %c2_i32 : i32 to vector<8x128xi32>
    %89 = arith.cmpi eq, %64, %88 : vector<8x128xi32>
    %90 = arith.andi %87, %89 : vector<8x128xi1>
    %91 = arith.extui %90 : vector<8x128xi1> to vector<8x128xi32>
    %92 = arith.sitofp %91 : vector<8x128xi32> to vector<8x128xf32>
    %93 = vector.broadcast %62 : vector<1x1xf32> to vector<8x128xf32>
    %94 = arith.mulf %92, %93 : vector<8x128xf32>
    %95 = arith.addf %85, %94 : vector<8x128xf32>
    %96 = arith.addf %66, %95 : vector<8x128xf32>
    %c0_26 = arith.constant 0 : index
    %c0_27 = arith.constant 0 : index
    %c0_28 = arith.constant 0 : index
    %97 = vector.load %arg8[%c0_26, %c0_27, %c0_28] : memref<1x8x128xf32, #tpu.memory_space<vmem>>, vector<1x8x128xf32>
    %98 = vector.shape_cast %97 : vector<1x8x128xf32> to vector<8x128xf32>
    %99 = vector.shape_cast %96 : vector<8x128xf32> to vector<1x8x128xf32>
    tpu.vector_store %arg8[%c0_26, %c0_27, %c0_28], %99 {strides = array<i32>} : memref<1x8x128xf32, #tpu.memory_space<vmem>>, vector<1x8x128xf32>,
    %c0_i32_29 = arith.constant 0 : i32
    %100 = arith.cmpi eq, %arg1, %c0_i32_29 : i32
    %101 = arith.extui %100 : i1 to i32
    %c0_i32_30 = arith.constant 0 : i32
    %102 = arith.cmpi ne, %101, %c0_i32_30 : i32
    scf.if %102 {
      %c0_31 = arith.constant 0 : index
      %c0_32 = arith.constant 0 : index
      %c0_33 = arith.constant 0 : index
      %103 = vector.load %arg6[%c0_31, %c0_32, %c0_33] : memref<1x8x128xf32, #tpu.memory_space<vmem>>, vector<1x8x128xf32>
      %104 = vector.shape_cast %103 : vector<1x8x128xf32> to vector<8x128xf32>
      %c0_34 = arith.constant 0 : index
      %c0_35 = arith.constant 0 : index
      %c0_36 = arith.constant 0 : index
      %105 = vector.load %arg7[%c0_34, %c0_35, %c0_36] : memref<1x8x128xf32, #tpu.memory_space<vmem>>, vector<1x8x128xf32>
      %106 = vector.shape_cast %105 : vector<1x8x128xf32> to vector<8x128xf32>
      %107 = vector.extract_strided_slice %104 {offsets = [0, 0], sizes = [1, 128], strides = [1, 1]} : vector<8x128xf32> to vector<1x128xf32>
      %108 = vector.extract_strided_slice %104 {offsets = [1, 0], sizes = [1, 128], strides = [1, 1]} : vector<8x128xf32> to vector<1x128xf32>
      %109 = vector.extract_strided_slice %104 {offsets = [2, 0], sizes = [1, 128], strides = [1, 1]} : vector<8x128xf32> to vector<1x128xf32>
      %110 = vector.extract_strided_slice %104 {offsets = [3, 0], sizes = [1, 128], strides = [1, 1]} : vector<8x128xf32> to vector<1x128xf32>
      %111 = vector.extract_strided_slice %104 {offsets = [4, 0], sizes = [1, 128], strides = [1, 1]} : vector<8x128xf32> to vector<1x128xf32>
      %112 = vector.extract_strided_slice %106 {offsets = [0, 0], sizes = [1, 128], strides = [1, 1]} : vector<8x128xf32> to vector<1x128xf32>
      %113 = vector.extract_strided_slice %106 {offsets = [1, 0], sizes = [1, 128], strides = [1, 1]} : vector<8x128xf32> to vector<1x128xf32>
      %114 = vector.extract_strided_slice %106 {offsets = [2, 0], sizes = [1, 128], strides = [1, 1]} : vector<8x128xf32> to vector<1x128xf32>
      %115 = vector.extract_strided_slice %106 {offsets = [3, 0], sizes = [1, 128], strides = [1, 1]} : vector<8x128xf32> to vector<1x128xf32>
      %116 = arith.subf %107, %112 : vector<1x128xf32>
      %117 = math.absf %116 : vector<1x128xf32>
      %118 = arith.subf %108, %113 : vector<1x128xf32>
      %119 = math.absf %118 : vector<1x128xf32>
      %120 = arith.addf %117, %119 : vector<1x128xf32>
      %121 = arith.subf %109, %114 : vector<1x128xf32>
      %122 = math.absf %121 : vector<1x128xf32>
      %123 = arith.addf %120, %122 : vector<1x128xf32>
      %124 = arith.subf %110, %115 : vector<1x128xf32>
      %125 = math.absf %124 : vector<1x128xf32>
      %126 = arith.addf %123, %125 : vector<1x128xf32>
      %127 = arith.mulf %111, %126 : vector<1x128xf32>
      %128 = vector.shape_cast %127 : vector<1x128xf32> to vector<1x1x128xf32>
      %cst_37 = arith.constant dense<0.000000e+00> : vector<1xf32>
      %129 = vector.multi_reduction <add>, %128, %cst_37 [1, 2] : vector<1x1x128xf32> to vector<1xf32>
      %130 = vector.shape_cast %129 : vector<1xf32> to vector<1x1x1xf32>
      %131 = vector.extract %130[0, 0, 0] : f32 from vector<1x1x1xf32>
      %132 = vector.broadcast %131 : f32 to vector<1x1xf32>
      %cst_38 = arith.constant 5.000000e-01 : f32
      %133 = vector.broadcast %cst_38 : f32 to vector<1x128xf32>
      %134 = arith.mulf %133, %109 : vector<1x128xf32>
      %135 = arith.subf %107, %134 : vector<1x128xf32>
      %cst_39 = arith.constant 5.000000e-01 : f32
      %136 = vector.broadcast %cst_39 : f32 to vector<1x128xf32>
      %137 = arith.mulf %136, %110 : vector<1x128xf32>
      %138 = arith.subf %108, %137 : vector<1x128xf32>
      %cst_40 = arith.constant 5.000000e-01 : f32
      %139 = vector.broadcast %cst_40 : f32 to vector<1x128xf32>
      %140 = arith.mulf %139, %109 : vector<1x128xf32>
      %141 = arith.addf %107, %140 : vector<1x128xf32>
      %cst_41 = arith.constant 5.000000e-01 : f32
      %142 = vector.broadcast %cst_41 : f32 to vector<1x128xf32>
      %143 = arith.mulf %142, %110 : vector<1x128xf32>
      %144 = arith.addf %108, %143 : vector<1x128xf32>
      %cst_42 = arith.constant 5.000000e-01 : f32
      %145 = vector.broadcast %cst_42 : f32 to vector<1x128xf32>
      %146 = arith.mulf %145, %114 : vector<1x128xf32>
      %147 = arith.subf %112, %146 : vector<1x128xf32>
      %cst_43 = arith.constant 5.000000e-01 : f32
      %148 = vector.broadcast %cst_43 : f32 to vector<1x128xf32>
      %149 = arith.mulf %148, %115 : vector<1x128xf32>
      %150 = arith.subf %113, %149 : vector<1x128xf32>
      %cst_44 = arith.constant 5.000000e-01 : f32
      %151 = vector.broadcast %cst_44 : f32 to vector<1x128xf32>
      %152 = arith.mulf %151, %114 : vector<1x128xf32>
      %153 = arith.addf %112, %152 : vector<1x128xf32>
      %cst_45 = arith.constant 5.000000e-01 : f32
      %154 = vector.broadcast %cst_45 : f32 to vector<1x128xf32>
      %155 = arith.mulf %154, %115 : vector<1x128xf32>
      %156 = arith.addf %113, %155 : vector<1x128xf32>
      %157 = arith.subf %141, %135 : vector<1x128xf32>
      %158 = arith.subf %144, %138 : vector<1x128xf32>
      %159 = arith.mulf %157, %158 : vector<1x128xf32>
      %160 = arith.subf %153, %147 : vector<1x128xf32>
      %161 = arith.subf %156, %150 : vector<1x128xf32>
      %162 = arith.mulf %160, %161 : vector<1x128xf32>
      %163 = arith.minimumf %141, %153 : vector<1x128xf32>
      %164 = arith.maximumf %135, %147 : vector<1x128xf32>
      %165 = arith.subf %163, %164 : vector<1x128xf32>
      %cst_46 = arith.constant 0.000000e+00 : f32
      %166 = vector.broadcast %cst_46 : f32 to vector<1x128xf32>
      %167 = arith.maximumf %166, %165 : vector<1x128xf32>
      %168 = arith.minimumf %144, %156 : vector<1x128xf32>
      %169 = arith.maximumf %138, %150 : vector<1x128xf32>
      %170 = arith.subf %168, %169 : vector<1x128xf32>
      %cst_47 = arith.constant 0.000000e+00 : f32
      %171 = vector.broadcast %cst_47 : f32 to vector<1x128xf32>
      %172 = arith.maximumf %171, %170 : vector<1x128xf32>
      %173 = arith.mulf %167, %172 : vector<1x128xf32>
      %174 = arith.addf %159, %162 : vector<1x128xf32>
      %175 = arith.subf %174, %173 : vector<1x128xf32>
      %176 = arith.divf %173, %175 : vector<1x128xf32>
      %177 = arith.maximumf %141, %153 : vector<1x128xf32>
      %178 = arith.minimumf %135, %147 : vector<1x128xf32>
      %179 = arith.subf %177, %178 : vector<1x128xf32>
      %cst_48 = arith.constant 0.000000e+00 : f32
      %180 = vector.broadcast %cst_48 : f32 to vector<1x128xf32>
      %181 = arith.maximumf %180, %179 : vector<1x128xf32>
      %182 = arith.maximumf %144, %156 : vector<1x128xf32>
      %183 = arith.minimumf %138, %150 : vector<1x128xf32>
      %184 = arith.subf %182, %183 : vector<1x128xf32>
      %cst_49 = arith.constant 0.000000e+00 : f32
      %185 = vector.broadcast %cst_49 : f32 to vector<1x128xf32>
      %186 = arith.maximumf %185, %184 : vector<1x128xf32>
      %187 = arith.mulf %181, %186 : vector<1x128xf32>
      %188 = arith.subf %187, %175 : vector<1x128xf32>
      %189 = arith.divf %188, %187 : vector<1x128xf32>
      %190 = arith.subf %176, %189 : vector<1x128xf32>
      %cst_50 = arith.constant 1.000000e+00 : f32
      %191 = vector.broadcast %cst_50 : f32 to vector<1x128xf32>
      %192 = arith.subf %191, %190 : vector<1x128xf32>
      %193 = arith.mulf %111, %192 : vector<1x128xf32>
      %194 = vector.shape_cast %193 : vector<1x128xf32> to vector<1x1x128xf32>
      %cst_51 = arith.constant dense<0.000000e+00> : vector<1xf32>
      %195 = vector.multi_reduction <add>, %194, %cst_51 [1, 2] : vector<1x1x128xf32> to vector<1xf32>
      %196 = vector.shape_cast %195 : vector<1xf32> to vector<1x1x1xf32>
      %197 = vector.extract %196[0, 0, 0] : f32 from vector<1x1x1xf32>
      %198 = vector.broadcast %197 : f32 to vector<1x1xf32>
      %c0_52 = arith.constant 0 : index
      %c0_53 = arith.constant 0 : index
      %c0_54 = arith.constant 0 : index
      %199 = vector.load %arg8[%c0_52, %c0_53, %c0_54] : memref<1x8x128xf32, #tpu.memory_space<vmem>>, vector<1x8x128xf32>
      %200 = vector.shape_cast %199 : vector<1x8x128xf32> to vector<8x128xf32>
      %c0_i32_55 = arith.constant 0 : i32
      %201 = vector.broadcast %c0_i32_55 : i32 to vector<8x128xi32>
      %202 = arith.cmpi eq, %63, %201 : vector<8x128xi32>
      %c3_i32_56 = arith.constant 3 : i32
      %203 = vector.broadcast %c3_i32_56 : i32 to vector<8x128xi32>
      %204 = arith.cmpi eq, %64, %203 : vector<8x128xi32>
      %205 = arith.andi %202, %204 : vector<8x128xi1>
      %206 = arith.extui %205 : vector<8x128xi1> to vector<8x128xi32>
      %207 = arith.sitofp %206 : vector<8x128xi32> to vector<8x128xf32>
      %208 = vector.broadcast %132 : vector<1x1xf32> to vector<8x128xf32>
      %209 = arith.mulf %207, %208 : vector<8x128xf32>
      %c0_i32_57 = arith.constant 0 : i32
      %210 = vector.broadcast %c0_i32_57 : i32 to vector<8x128xi32>
      %211 = arith.cmpi eq, %63, %210 : vector<8x128xi32>
      %c4_i32 = arith.constant 4 : i32
      %212 = vector.broadcast %c4_i32 : i32 to vector<8x128xi32>
      %213 = arith.cmpi eq, %64, %212 : vector<8x128xi32>
      %214 = arith.andi %211, %213 : vector<8x128xi1>
      %215 = arith.extui %214 : vector<8x128xi1> to vector<8x128xi32>
      %216 = arith.sitofp %215 : vector<8x128xi32> to vector<8x128xf32>
      %217 = vector.broadcast %198 : vector<1x1xf32> to vector<8x128xf32>
      %218 = arith.mulf %216, %217 : vector<8x128xf32>
      %219 = arith.addf %209, %218 : vector<8x128xf32>
      %220 = arith.addf %200, %219 : vector<8x128xf32>
      %c0_58 = arith.constant 0 : index
      %c0_59 = arith.constant 0 : index
      %c0_60 = arith.constant 0 : index
      %221 = vector.load %arg8[%c0_58, %c0_59, %c0_60] : memref<1x8x128xf32, #tpu.memory_space<vmem>>, vector<1x8x128xf32>
      %222 = vector.shape_cast %221 : vector<1x8x128xf32> to vector<8x128xf32>
      %223 = vector.shape_cast %220 : vector<8x128xf32> to vector<1x8x128xf32>
      tpu.vector_store %arg8[%c0_58, %c0_59, %c0_60], %223 {strides = array<i32>} : memref<1x8x128xf32, #tpu.memory_space<vmem>>, vector<1x8x128xf32>,
    } else {
    }
    return
  }
  func.func @transform_0(%arg0: i32, %arg1: i32, %arg2: memref<2xi32, #tpu.memory_space<smem>>) -> (i32, i32, i32, i32) {
    %c0_i32 = arith.constant 0 : i32
    %c0_i32_0 = arith.constant 0 : i32
    %c0_i32_1 = arith.constant 0 : i32
    return %arg0, %arg1, %c0_i32, %c0_i32_0 : i32, i32, i32, i32
  }
  func.func @transform_1(%arg0: i32, %arg1: i32, %arg2: memref<2xi32, #tpu.memory_space<smem>>) -> (i32, i32, i32, i32) {
    %c0_i32 = arith.constant 0 : i32
    %c0_i32_0 = arith.constant 0 : i32
    %c0_i32_1 = arith.constant 0 : i32
    return %arg0, %arg1, %c0_i32, %c0_i32_0 : i32, i32, i32, i32
  }
  func.func @transform_2(%arg0: i32, %arg1: i32, %arg2: memref<2xi32, #tpu.memory_space<smem>>) -> (i32, i32) {
    %c0_i32 = arith.constant 0 : i32
    %c0_i32_0 = arith.constant 0 : i32
    %c0_i32_1 = arith.constant 0 : i32
    return %c0_i32, %c0_i32_0 : i32, i32
  }
  func.func @transform_3(%arg0: i32, %arg1: i32, %arg2: memref<2xi32, #tpu.memory_space<smem>>) -> (i32, i32, i32) {
    %c0_i32 = arith.constant 0 : i32
    %c0_i32_0 = arith.constant 0 : i32
    %c0_i32_1 = arith.constant 0 : i32
    return %arg0, %c0_i32, %c0_i32_0 : i32, i32, i32
  }
  func.func @transform_4(%arg0: i32, %arg1: i32, %arg2: memref<2xi32, #tpu.memory_space<smem>>) -> (i32, i32, i32) {
    %c0_i32 = arith.constant 0 : i32
    %c0_i32_0 = arith.constant 0 : i32
    %c0_i32_1 = arith.constant 0 : i32
    return %arg0, %c0_i32, %c0_i32_0 : i32, i32, i32
  }
  func.func @transform_5(%arg0: i32, %arg1: i32, %arg2: memref<2xi32, #tpu.memory_space<smem>>) -> (i32, i32, i32) {
    %c0_i32 = arith.constant 0 : i32
    %c0_i32_0 = arith.constant 0 : i32
    %c0_i32_1 = arith.constant 0 : i32
    return %arg0, %c0_i32, %c0_i32_0 : i32, i32, i32
  }
}

</mosaic_0001>

<llo_original>
// kernel: tpu_custom_call.1
$region0: #{tpu_custom_call.1}
  #allocation0 [shape = 'u32[]', space=smem, size = 0x4, offset = 0x4, fixed_abs, tag = 'smem constant byte address 0x4 - core index']
  #allocation1 [shape = 'u32[72,128]{1,0:T(1,128)}', space=vmem, size = 0x9000, scoped, tag = 'internal scratch']
  #allocation2 [shape = 's32[1]{0}', space=sflag, size = 0x4, scoped, tag = 'scoped memory for tpu_custom_call.1']
  #allocation3 [shape = 'u8[512]{0}', space=smem, size = 0x200, scoped, tag = 'prefetched SMEM operand 0']
  %s0 = inlined_call_operand.vmem [shape: s32[2], index: 0, kind: input, shape index: {}]
  %s1 = inlined_call_operand.vmem [shape: f32[3,2,8,4], index: 1, kind: input, shape index: {}]
  %s2 = inlined_call_operand.vmem [shape: s32[3,2,8,1], index: 2, kind: input, shape index: {}]
  %s3 = inlined_call_operand.vmem [shape: f32[1,4], index: 3, kind: input, shape index: {}]
  %s4 = inlined_call_operand.vmem [shape: f32[3,8,128], index: 4, kind: input, shape index: {}]
  %s5 = inlined_call_operand.vmem [shape: f32[3,8,128], index: 5, kind: input, shape index: {}]
  %s6 = inlined_call_operand.hbm [shape: f32[3,8,128], index: 6, kind: output, shape index: {}]
  %s7 = sld [smem:[#allocation0]]
  $region61: #{tpu_custom_call.1} parent=0
    _
  %s9 = ssub.s32 1, %s7
  %s10 = scalar_select 0, %s9, %s7
  %s12 = sshll.u32 %s0, 4
  %s13 = int_to_ptr.vmem [resolvable:$true] %s12
  %15 = dma.vmem_to_smem %s13, 16, [#allocation3], [#allocation2]
  %17 = dma.done [#allocation2], 16
  %18 = sfence
  $region1: #{tpu_custom_call.1} parent=0
    #allocation4 [shape = 'u8[8192]{0}', space=vmem, size = 0x2000, scoped, tag = 'output window, operand 0']
    #allocation5 [shape = 's32[2]{0}', space=sflag, size = 0x8, scoped, tag = 'scoped memory for tpu_custom_call.1']
    %19 = vsyncpa [#allocation5], 0
    %s20 = scalar_lea.sflag [#allocation5], 1
    %21 = vsyncpa %s20, 0
    loop: start=0, step=1, limit=8
    $region2: #{tpu_custom_call.1} parent=1 // loop_pre_header
      _
    $region3: #{tpu_custom_call.1} parent=1 // loop_header
      %s23 = sphi 0, %s27
      %p24 = scmp.ge.s32.totalorder %s23, 8
      %s30 = sphi 0, %s42
      %s31 = sphi 0, %s38
      %s32 = sphi 0, %s30
      %s33 = sphi 0, %s31
      %s34 = sphi 0, %s32
      %s35 = sphi 0, %s33
      %s47 = sphi 0, %s49
      %s50 = sphi 0, %s47
      %s51 = sphi 0, %s50
      %s67 = sphi 0, %s51
      %s75 = sphi 0, %s77
      %s78 = sphi 0, %s75
      %s79 = sphi 0, %s78
      %s95 = sphi 0, %s79
      %s99 = sphi 0, %s99
      %s101 = sphi 0, %s99
      %s102 = sphi 0, %s101
      %s116 = sphi 0, %s102
      %s122 = sphi 0, %s124
      %s125 = sphi 0, %s122
      %s126 = sphi 0, %s125
      %s142 = sphi 0, %s126
      %s148 = sphi 0, %s150
      %s151 = sphi 0, %s148
      %s152 = sphi 0, %s151
      %s168 = sphi 0, %s152
      %s174 = sphi 0, %s176
      %s177 = sphi 0, %s174
      %s178 = sphi 0, %s177
      %s194 = sphi 0, %s178
    $region4: #{tpu_custom_call.1} parent=1 // loop_header_branch
      %26 = sbr.rel (%p24) target = $region8
    $region5: #{tpu_custom_call.1} parent=1 // loop_body
      %s28 = ssub.s32 %s23, 1
      %s29 = ssub.s32 %s23, 2
      %s36 = sadd.s32 1, %s31
      %p37 = scmp.ge.s32.totalorder %s36, 2
      %s38 = scalar_select %p37, 0, %s36
      %s39 = sadd.s32 1, %s30
      %s40 = scalar_select %p37, %s39, %s30
      %p41 = scmp.ge.s32.totalorder %s40, 3
      %s42 = scalar_select %p41, 0, %s40
      %s43 = ssub.s32 %s30, %s42
      %s44 = ssub.s32 %s31, %s38
      %s45 = sor.u32 %s43, %s44
      %p46 = scmp.eq.s32.totalorder %s45, 0
      %s48 = sadd.s32 %s47, 1
      %s49 = scalar_select %p46, %s47, %s48
      %p52 = pneg %p46
      %p53 = scmp.eq.s32.totalorder %s23, 5
      %p54 = por %p52, %p53
      %p55 = scmp.ne.s32.totalorder %s47, %s50
      %p56 = scmp.eq.s32.totalorder %s23, 0
      %p57 = por %p55, %p56
      %p58 = scmp.ne.s32.totalorder %s47, %s50
      %p59 = scmp.eq.s32.totalorder %s28, 5
      %p60 = por %p58, %p59
      %p61 = scmp.ne.s32.totalorder %s50, %s51
      %p62 = scmp.eq.s32.totalorder %s28, 0
      %p63 = por %p61, %p62
      %p64 = scmp.ne.s32.totalorder %s50, %s51
      %p65 = scmp.eq.s32.totalorder %s29, 5
      %p66 = por %p64, %p65
      %p68 = scmp.ne.s32.totalorder %s51, %s67
      %p69 = scmp.eq.s32.totalorder %s29, 0
      %p70 = por %p68, %p69
      %s71 = ssub.s32 %s30, %s42
      %s72 = ssub.s32 %s31, %s38
      %s73 = sor.u32 %s71, %s72
      %p74 = scmp.eq.s32.totalorder %s73, 0
      %s76 = sadd.s32 %s75, 1
      %s77 = scalar_select %p74, %s75, %s76
      %p80 = pneg %p74
      %p81 = scmp.eq.s32.totalorder %s23, 5
      %p82 = por %p80, %p81
      %p83 = scmp.ne.s32.totalorder %s75, %s78
      %p84 = scmp.eq.s32.totalorder %s23, 0
      %p85 = por %p83, %p84
      %p86 = scmp.ne.s32.totalorder %s75, %s78
      %p87 = scmp.eq.s32.totalorder %s28, 5
      %p88 = por %p86, %p87
      %p89 = scmp.ne.s32.totalorder %s78, %s79
      %p90 = scmp.eq.s32.totalorder %s28, 0
      %p91 = por %p89, %p90
      %p92 = scmp.ne.s32.totalorder %s78, %s79
      %p93 = scmp.eq.s32.totalorder %s29, 5
      %p94 = por %p92, %p93
      %p96 = scmp.ne.s32.totalorder %s79, %s95
      %p97 = scmp.eq.s32.totalorder %s29, 0
      %p98 = por %p96, %p97
      %s100 = sadd.s32 %s99, 1
      %p103 = scmp.eq.s32.totalorder %s23, 5
      %p104 = scmp.ne.s32.totalorder %s99, %s101
      %p105 = scmp.eq.s32.totalorder %s23, 0
      %p106 = por %p104, %p105
      %p107 = scmp.ne.s32.totalorder %s99, %s101
      %p108 = scmp.eq.s32.totalorder %s28, 5
      %p109 = por %p107, %p108
      %p110 = scmp.ne.s32.totalorder %s101, %s102
      %p111 = scmp.eq.s32.totalorder %s28, 0
      %p112 = por %p110, %p111
      %p113 = scmp.ne.s32.totalorder %s101, %s102
      %p114 = scmp.eq.s32.totalorder %s29, 5
      %p115 = por %p113, %p114
      %p117 = scmp.ne.s32.totalorder %s102, %s116
      %p118 = scmp.eq.s32.totalorder %s29, 0
      %p119 = por %p117, %p118
      %s120 = ssub.s32 %s30, %s42
      %p121 = scmp.eq.s32.totalorder %s120, 0
      %s123 = sadd.s32 %s122, 1
      %s124 = scalar_select %p121, %s122, %s123
      %p127 = pneg %p121
      %p128 = scmp.eq.s32.totalorder %s23, 5
      %p129 = por %p127, %p128
      %p130 = scmp.ne.s32.totalorder %s122, %s125
      %p131 = scmp.eq.s32.totalorder %s23, 0
      %p132 = por %p130, %p131
      %p133 = scmp.ne.s32.totalorder %s122, %s125
      %p134 = scmp.eq.s32.totalorder %s28, 5
      %p135 = por %p133, %p134
      %p136 = scmp.ne.s32.totalorder %s125, %s126
      %p137 = scmp.eq.s32.totalorder %s28, 0
      %p138 = por %p136, %p137
      %p139 = scmp.ne.s32.totalorder %s125, %s126
      %p140 = scmp.eq.s32.totalorder %s29, 5
      %p141 = por %p139, %p140
      %p143 = scmp.ne.s32.totalorder %s126, %s142
      %p144 = scmp.eq.s32.totalorder %s29, 0
      %p145 = por %p143, %p144
      %s146 = ssub.s32 %s30, %s42
      %p147 = scmp.eq.s32.totalorder %s146, 0
      %s149 = sadd.s32 %s148, 1
      %s150 = scalar_select %p147, %s148, %s149
      %p153 = pneg %p147
      %p154 = scmp.eq.s32.totalorder %s23, 5
      %p155 = por %p153, %p154
      %p156 = scmp.ne.s32.totalorder %s148, %s151
      %p157 = scmp.eq.s32.totalorder %s23, 0
      %p158 = por %p156, %p157
      %p159 = scmp.ne.s32.totalorder %s148, %s151
      %p160 = scmp.eq.s32.totalorder %s28, 5
      %p161 = por %p159, %p160
      %p162 = scmp.ne.s32.totalorder %s151, %s152
      %p163 = scmp.eq.s32.totalorder %s28, 0
      %p164 = por %p162, %p163
      %p165 = scmp.ne.s32.totalorder %s151, %s152
      %p166 = scmp.eq.s32.totalorder %s29, 5
      %p167 = por %p165, %p166
      %p169 = scmp.ne.s32.totalorder %s152, %s168
      %p170 = scmp.eq.s32.totalorder %s29, 0
      %p171 = por %p169, %p170
      %s172 = ssub.s32 %s30, %s42
      %p173 = scmp.eq.s32.totalorder %s172, 0
      %s175 = sadd.s32 %s174, 1
      %s176 = scalar_select %p173, %s174, %s175
      %p179 = pneg %p173
      %p180 = scmp.eq.s32.totalorder %s23, 5
      %p181 = por %p179, %p180
      %p182 = scmp.ne.s32.totalorder %s174, %s177
      %p183 = scmp.eq.s32.totalorder %s23, 0
      %p184 = por %p182, %p183
      %p185 = scmp.ne.s32.totalorder %s174, %s177
      %p186 = scmp.eq.s32.totalorder %s28, 5
      %p187 = por %p185, %p186
      %p188 = scmp.ne.s32.totalorder %s177, %s178
      %p189 = scmp.eq.s32.totalorder %s28, 0
      %p190 = por %p188, %p189
      %p191 = scmp.ne.s32.totalorder %s177, %s178
      %p192 = scmp.eq.s32.totalorder %s29, 5
      %p193 = por %p191, %p192
      %p195 = scmp.ne.s32.totalorder %s178, %s194
      %p196 = scmp.eq.s32.totalorder %s29, 0
      %p197 = por %p195, %p196
      %p198 = scmp.le.s32.totalorder 1, %s23
      %p199 = scmp.lt.s32.totalorder %s23, 7
      %p200 = pnand %p198, %p199
      %p201 = pneg %p200
      // Predicated region
      $region9: #{tpu_custom_call.1} parent=5 // pred_check
        _
      $region10: #{tpu_custom_call.1} parent=5 // pred_check_branch
        %203 = sbr.rel (%p200) target = $region12
      $region11: #{tpu_custom_call.1} parent=5 // pred_region
        %s204 = ssub.s32 %s23, 1
        // Predicated region
        $region13: #{tpu_custom_call.1} parent=11 // pred_check
          %p205 = pneg %p112
        $region14: #{tpu_custom_call.1} parent=11 // pred_check_branch
          %207 = sbr.rel (%p205) target = $region16
        $region15: #{tpu_custom_call.1} parent=11 // pred_region
          _
        $region16: #{tpu_custom_call.1} parent=11 // pred_fallthru
          _
      $region12: #{tpu_custom_call.1} parent=5 // pred_fallthru
        _
      %p208 = scmp.lt.s32.totalorder %s23, 6
      // Predicated region
      $region17: #{tpu_custom_call.1} parent=5 // pred_check
        %p209 = pneg %p208
      $region18: #{tpu_custom_call.1} parent=5 // pred_check_branch
        %211 = sbr.rel (%p209) target = $region20
      $region19: #{tpu_custom_call.1} parent=5 // pred_region
        // Predicated region
        $region21: #{tpu_custom_call.1} parent=19 // pred_check
          %p212 = pneg %p57
        $region22: #{tpu_custom_call.1} parent=19 // pred_check_branch
          %214 = sbr.rel (%p212) target = $region24
        $region23: #{tpu_custom_call.1} parent=19 // pred_region
          %p215 = scmp.lt.s32.totalorder %s30, 2
          %s216 = scalar_select %p215, %s30, 2
          %p217 = scmp.lt.s32.totalorder %s31, 1
          %s218 = scalar_select %p217, %s31, 1
          %s219 = smul.addr %s216, 2
          %s220 = sadd.s32 %s218, %s219
          %s221 = smul.addr %s220, 8
          %s222 = scalar_lea.vmem %s1, %s221
        $region24: #{tpu_custom_call.1} parent=19 // pred_fallthru
          _
        // Predicated region
        $region25: #{tpu_custom_call.1} parent=19 // pred_check
          %p223 = pneg %p85
        $region26: #{tpu_custom_call.1} parent=19 // pred_check_branch
          %225 = sbr.rel (%p223) target = $region28
        $region27: #{tpu_custom_call.1} parent=19 // pred_region
          %p226 = scmp.lt.s32.totalorder %s30, 2
          %s227 = scalar_select %p226, %s30, 2
          %p228 = scmp.lt.s32.totalorder %s31, 1
          %s229 = scalar_select %p228, %s31, 1
          %s230 = smul.addr %s227, 2
          %s231 = sadd.s32 %s229, %s230
          %s232 = smul.addr %s231, 8
          %s233 = scalar_lea.vmem %s2, %s232
        $region28: #{tpu_custom_call.1} parent=19 // pred_fallthru
          _
        // Predicated region
        $region29: #{tpu_custom_call.1} parent=19 // pred_check
          %p234 = pneg %p132
        $region30: #{tpu_custom_call.1} parent=19 // pred_check_branch
          %236 = sbr.rel (%p234) target = $region32
        $region31: #{tpu_custom_call.1} parent=19 // pred_region
          %p237 = scmp.lt.s32.totalorder %s30, 2
          %s238 = scalar_select %p237, %s30, 2
          %s239 = smul.addr %s238, 8
          %s240 = scalar_lea.vmem %s4, %s239
        $region32: #{tpu_custom_call.1} parent=19 // pred_fallthru
          _
        // Predicated region
        $region33: #{tpu_custom_call.1} parent=19 // pred_check
          %p241 = pneg %p158
        $region34: #{tpu_custom_call.1} parent=19 // pred_check_branch
          %243 = sbr.rel (%p241) target = $region36
        $region35: #{tpu_custom_call.1} parent=19 // pred_region
          %p244 = scmp.lt.s32.totalorder %s30, 2
          %s245 = scalar_select %p244, %s30, 2
          %s246 = smul.addr %s245, 8
          %s247 = scalar_lea.vmem %s5, %s246
        $region36: #{tpu_custom_call.1} parent=19 // pred_fallthru
          _
      $region20: #{tpu_custom_call.1} parent=5 // pred_fallthru
        _
      %p248 = scmp.le.s32.totalorder 1, %s23
      %p249 = scmp.lt.s32.totalorder %s23, 7
      %p250 = pnand %p248, %p249
      %p251 = pneg %p250
      // Predicated region
      $region37: #{tpu_custom_call.1} parent=5 // pred_check
        _
      $region38: #{tpu_custom_call.1} parent=5 // pred_check_branch
        %253 = sbr.rel (%p250) target = $region40
      $region39: #{tpu_custom_call.1} parent=5 // pred_region
        %s254 = ssub.s32 %s23, 1
        %p255 = scmp.lt.s32.totalorder %s32, 2
        %s256 = scalar_select %p255, %s32, 2
        %p257 = scmp.lt.s32.totalorder %s33, 1
        %s258 = scalar_select %p257, %s33, 1
        %s259 = smul.addr %s256, 2
        %s260 = sadd.s32 %s258, %s259
        %s261 = smul.addr %s260, 8
        %s262 = scalar_lea.vmem %s1, %s261
        %p263 = pneg %p63
        %p264 = pneg %p60
        %p265 = scmp.lt.s32.totalorder %s32, 2
        %s266 = scalar_select %p265, %s32, 2
        %p267 = scmp.lt.s32.totalorder %s33, 1
        %s268 = scalar_select %p267, %s33, 1
        %s269 = smul.addr %s266, 2
        %s270 = sadd.s32 %s268, %s269
        %s271 = smul.addr %s270, 8
        %s272 = scalar_lea.vmem %s2, %s271
        %p273 = pneg %p91
        %p274 = pneg %p88
        %p275 = pneg %p112
        %p276 = pneg %p109
        %p277 = scmp.lt.s32.totalorder %s32, 2
        %s278 = scalar_select %p277, %s32, 2
        %s279 = smul.addr %s278, 8
        %s280 = scalar_lea.vmem %s4, %s279
        %p281 = pneg %p138
        %p282 = pneg %p135
        %p283 = scmp.lt.s32.totalorder %s32, 2
        %s284 = scalar_select %p283, %s32, 2
        %s285 = smul.addr %s284, 8
        %s286 = scalar_lea.vmem %s5, %s285
        %p287 = pneg %p164
        %p288 = pneg %p161
        %p289 = pneg %p190
        %p290 = pneg %p187
        %s291 = sand.u32 %s177, 1
        %s292 = scalar_lea.sflag [#allocation5], %s291
        %s293 = sand.u32 %s177, 1
        %s294 = smul.addr %s293, 8
        %s295 = scalar_lea.vmem [#allocation4], %s294
        %p296 = scmp.lt.s32.totalorder %s32, 2
        %s297 = scalar_select %p296, %s32, 2
        %p298 = scmp.lt.s32.totalorder %s33, 1
        %s299 = scalar_select %p298, %s33, 1
        %s300 = smul.addr %s297, 2
        %s301 = sadd.s32 %s299, %s300
        %s302 = smul.addr %s301, 8
        %s303 = scalar_lea.vmem %s1, %s302
        %p304 = scmp.lt.s32.totalorder %s32, 2
        %s305 = scalar_select %p304, %s32, 2
        %p306 = scmp.lt.s32.totalorder %s33, 1
        %s307 = scalar_select %p306, %s33, 1
        %s308 = smul.addr %s305, 2
        %s309 = sadd.s32 %s307, %s308
        %s310 = smul.addr %s309, 8
        %s311 = scalar_lea.vmem %s2, %s310
        %p312 = scmp.lt.s32.totalorder %s32, 2
        %s313 = scalar_select %p312, %s32, 2
        %s314 = smul.addr %s313, 8
        %s315 = scalar_lea.vmem %s4, %s314
        %p316 = scmp.lt.s32.totalorder %s32, 2
        %s317 = scalar_select %p316, %s32, 2
        %s318 = smul.addr %s317, 8
        %s319 = scalar_lea.vmem %s5, %s318
        %p320 = scmp.eq.s32.totalorder %s33, 0
        // Predicated region
        $region41: #{tpu_custom_call.1} parent=39 // pred_check
          %p321 = pneg %p320
        $region42: #{tpu_custom_call.1} parent=39 // pred_check_branch
          %323 = sbr.rel (%p321) target = $region44
        $region43: #{tpu_custom_call.1} parent=39 // pred_region
          %324 = vst [vmem:[%s295] sm:$0xff] 0.0
        $region44: #{tpu_custom_call.1} parent=39 // pred_fallthru
          _
        %v325 = vld [vmem:[%s303] sm:$0xff]
        %v326 = vld [vmem:[%s311] sm:$0xff]
        %v327 = vlaneseq
        %v328 = vand.u32 %v327, 127
        %329 = vset.pattern.permute.xlu0 0
        %330 = vperm.xlu0 %329, %v326
        %v331 = vpop.permute.xlu0 %330
        %vm332 = vcmp.eq.s32.totalorder %v328, %v331
        %v333 = vsel %vm332, 1, 0
        %v334 = vcvt.s32.f32 %v333
        %vm335 = vcmask 31744
        %v336 = vsel %vm335, %v325, -inf
        %337 = vmax.xlane.f32.xlu0 %v336
        %v338 = vpop.xlane.xlu0 %337
        %v339 = vsub.f32 %v325, %v338
        %v340 = vmul.f32 %v339, 1.442695
        %v341 = vpow.pop %v340
        %v342 = vsel %vm335, %v341, 0.0
        %343 = vadd.xlane.f32.xlu0 %v342
        %v344 = vpop.xlane.xlu0 %343
        %v345 = vlog2.pop %v344
        %v346 = vmul.f32 %v345, 0.6931472
        %v347 = vadd.f32 %v338, %v346
        %v348 = vld [vmem:[%s3] sm:$0x1]
        %v350 = vperm.slane %v348, 0
        %v352 = vmul.f32 %v334, %v350
        %v353 = vsub.f32 %v347, %v325
        %v354 = vmul.f32 %v352, %v353
        %v355 = vsel %vm335, %v354, 0.0
        %356 = vadd.xlane.f32.xlu0 %v355
        %v357 = vpop.xlane.xlu0 %356
        %v358 = vrot.slane %v357, 4
        %v359 = vadd.f32 %v357, %v358
        %v360 = vrot.slane %v359, 2
        %v361 = vadd.f32 %v359, %v360
        %v362 = vrot.slane %v361, 1
        %v363 = vadd.f32 %v361, %v362
        %s364 = vtos %v363
        %v365 = vsel %vm335, %v352, 0.0
        %366 = vadd.xlane.f32.xlu0 %v365
        %v367 = vpop.xlane.xlu0 %366
        %v368 = vrot.slane %v367, 4
        %v369 = vadd.f32 %v367, %v368
        %v370 = vrot.slane %v369, 2
        %v371 = vadd.f32 %v369, %v370
        %v372 = vrot.slane %v371, 1
        %v373 = vadd.f32 %v371, %v372
        %s374 = vtos %v373
        %vm375 = vcmp.lt.s32.totalorder %v328, 3
        %v376 = vsel %vm375, %v325, -1e+30
        %v377 = vsel %vm335, %v376, -inf
        %378 = vmax.xlane.f32.xlu0 %v377
        %v379 = vpop.xlane.xlu0 %378
        %vm380 = vcmp.eq.s32.totalorder %v328, 3
        %v381 = vsel %vm380, %v325, 0.0
        %v382 = vsel %vm335, %v381, 0.0
        %383 = vadd.xlane.f32.xlu0 %v382
        %v384 = vpop.xlane.xlu0 %383
        %vm385 = vcmp.ge.f32.partialorder %v379, %v384
        %v386 = vsel %vm385, 1, 0
        %v387 = vcvt.s32.f32 %v386
        %vm388 = vcmask 7168
        %v389 = vsel %vm388, %v387, 0.0
        %390 = vadd.xlane.f32.xlu0 %v389
        %v391 = vpop.xlane.xlu0 %390
        %v392 = vrot.slane %v391, 4
        %v393 = vadd.f32 %v391, %v392
        %v394 = vrot.slane %v393, 2
        %v395 = vadd.f32 %v393, %v394
        %v396 = vrot.slane %v395, 1
        %v397 = vadd.f32 %v395, %v396
        %s398 = vtos %v397
        %v399 = vstv %s398
        %s400 = sld [smem:[#allocation3 + %s33]]
        %s401 = scvt.s32.f32 %s400
        %v402 = vstv %s401
        %v403 = vsub.f32 %v399, %v402
        %v404 = vand.u32 2147483647, %v403
        %v405 = vlaneseq
        %v406 = vshrl.u32 %v405, 7
        %v407 = vld [vmem:[%s295] sm:$0xff]
        %vm408 = vcmp.eq.s32.totalorder %v406, 0
        %vm409 = vcmp.eq.s32.totalorder %v328, 0
        %vm410 = vmand %vm408, %vm409
        %v411 = vsel %vm410, 1, 0
        %v412 = vcvt.s32.f32 %v411
        %v413 = vstv %s364
        %v414 = vmul.f32 %v412, %v413
        %vm415 = vcmp.eq.s32.totalorder %v328, 1
        %vm416 = vmand %vm408, %vm415
        %v417 = vsel %vm416, 1, 0
        %v418 = vcvt.s32.f32 %v417
        %v419 = vstv %s374
        %v420 = vmul.f32 %v418, %v419
        %v421 = vadd.f32 %v414, %v420
        %vm422 = vcmp.eq.s32.totalorder %v328, 2
        %vm423 = vmand %vm408, %vm422
        %v424 = vsel %vm423, 1, 0
        %v425 = vcvt.s32.f32 %v424
        %v426 = vmul.f32 %v425, %v404
        %v427 = vadd.f32 %v421, %v426
        %v428 = vadd.f32 %v407, %v427
        %429 = vst [vmem:[%s295] sm:$0xff] %v428
        // Predicated region
        $region45: #{tpu_custom_call.1} parent=39 // pred_check
          %p430 = pneg %p320
        $region46: #{tpu_custom_call.1} parent=39 // pred_check_branch
          %432 = sbr.rel (%p430) target = $region48
        $region47: #{tpu_custom_call.1} parent=39 // pred_region
          %v433 = vld [vmem:[%s315] sm:$0xff]
          %v434 = vld [vmem:[%s319] sm:$0xff]
          %v435 = vsub.f32 %v433, %v434
          %v436 = vand.u32 2147483647, %v435
          %v438 = vrot.slane %v436, 1
          %v440 = vadd.f32 %v436, %v438
          %v441 = vrot.slane %v436, 2
          %v443 = vadd.f32 %v440, %v441
          %v444 = vrot.slane %v436, 3
          %v446 = vadd.f32 %v443, %v444
          %v448 = vrot.slane %v446, 4
          %v450 = vmul.f32 %v433, %v448
          %v452 = vrot.slane %v450, 4
          %vm454 = vcmask 1040384
          %v455 = vsel %vm454, %v452, 0.0
          %456 = vadd.xlane.f32.xlu0 %v455
          %v457 = vpop.xlane.xlu0 %456
          %v458 = vrot.slane %v457, 4
          %v459 = vadd.f32 %v457, %v458
          %v460 = vrot.slane %v459, 2
          %v461 = vadd.f32 %v459, %v460
          %v462 = vrot.slane %v461, 1
          %v463 = vadd.f32 %v461, %v462
          %s464 = vtos %v463
          %v465 = vmul.f32 %v433, 0.5
          %v467 = vrot.slane %v465, 2
          %v469 = vsub.f32 %v433, %v467
          %v470 = vadd.f32 %v433, %v467
          %v471 = vmul.f32 %v434, 0.5
          %v473 = vrot.slane %v471, 2
          %v475 = vsub.f32 %v434, %v473
          %v476 = vadd.f32 %v434, %v473
          %v477 = vsub.f32 %v470, %v469
          %v479 = vrot.slane %v477, 1
          %v481 = vmul.f32 %v477, %v479
          %v482 = vsub.f32 %v476, %v475
          %v484 = vrot.slane %v482, 1
          %v486 = vmul.f32 %v482, %v484
          %v487 = vmin.f32 %v470, %v476
          %v488 = vmax.f32 %v469, %v475
          %v489 = vsub.f32 %v487, %v488
          %v490 = vmax.f32 %v489, 0.0
          %v492 = vrot.slane %v490, 1
          %v494 = vmul.f32 %v490, %v492
          %v495 = vadd.f32 %v481, %v486
          %v496 = vsub.f32 %v495, %v494
          %v497 = vrcp.pop %v496
          %v498 = vmul.f32 %v496, %v497
          %v499 = vsub.f32 1.0, %v498
          %v500 = vmul.f32 %v497, %v499
          %v501 = vadd.f32 %v497, %v500
          %vm502 = vweird.f32 %v496
          %vm503 = vweird.f32 %v497
          %vm504 = vmor %vm502, %vm503
          %v505 = vsel %vm504, %v497, %v501
          %v506 = vand.u32 2147483647, %v496
          %vm507 = vcmp.eq.f32.partialorder %v506, 8.507059e+37
          %v508 = vand.u32 %v496, 2147483648
          %v509 = vor.u32 1.1754944e-38, %v508
          %v510 = vsel %vm507, %v509, %v505
          %v511 = vmul.f32 %v494, %v510
          %v512 = vmax.f32 %v470, %v476
          %v513 = vmin.f32 %v469, %v475
          %v514 = vsub.f32 %v512, %v513
          %v515 = vmax.f32 %v514, 0.0
          %v517 = vrot.slane %v515, 1
          %v519 = vmul.f32 %v515, %v517
          %v520 = vsub.f32 %v519, %v496
          %v521 = vrcp.pop %v519
          %v522 = vmul.f32 %v519, %v521
          %v523 = vsub.f32 1.0, %v522
          %v524 = vmul.f32 %v521, %v523
          %v525 = vadd.f32 %v521, %v524
          %vm526 = vweird.f32 %v519
          %vm527 = vweird.f32 %v521
          %vm528 = vmor %vm526, %vm527
          %v529 = vsel %vm528, %v521, %v525
          %v530 = vand.u32 2147483647, %v519
          %vm531 = vcmp.eq.f32.partialorder %v530, 8.507059e+37
          %v532 = vand.u32 %v519, 2147483648
          %v533 = vor.u32 1.1754944e-38, %v532
          %v534 = vsel %vm531, %v533, %v529
          %v535 = vmul.f32 %v520, %v534
          %v536 = vsub.f32 %v511, %v535
          %v537 = vsub.f32 1.0, %v536
          %v539 = vrot.slane %v537, 4
          %v541 = vmul.f32 %v433, %v539
          %v543 = vrot.slane %v541, 4
          %v545 = vsel %vm454, %v543, 0.0
          %546 = vadd.xlane.f32.xlu0 %v545
          %v547 = vpop.xlane.xlu0 %546
          %v548 = vrot.slane %v547, 4
          %v549 = vadd.f32 %v547, %v548
          %v550 = vrot.slane %v549, 2
          %v551 = vadd.f32 %v549, %v550
          %v552 = vrot.slane %v551, 1
          %v553 = vadd.f32 %v551, %v552
          %s554 = vtos %v553
          %v555 = vld [vmem:[%s295] sm:$0xff]
          %vm556 = vmand %vm408, %vm380
          %v557 = vsel %vm556, 1, 0
          %v558 = vcvt.s32.f32 %v557
          %v559 = vstv %s464
          %v560 = vmul.f32 %v558, %v559
          %vm561 = vcmp.eq.s32.totalorder %v328, 4
          %vm562 = vmand %vm408, %vm561
          %v563 = vsel %vm562, 1, 0
          %v564 = vcvt.s32.f32 %v563
          %v565 = vstv %s554
          %v566 = vmul.f32 %v564, %v565
          %v567 = vadd.f32 %v560, %v566
          %v568 = vadd.f32 %v555, %v567
          %569 = vst [vmem:[%s295] sm:$0xff] %v568
        $region48: #{tpu_custom_call.1} parent=39 // pred_fallthru
          _
        %s570 = sand.u32 %s177, 1
        %s571 = scalar_lea.sflag [#allocation5], %s570
        %s572 = sand.u32 %s177, 1
        %s573 = smul.addr %s572, 8
        %s574 = scalar_lea.vmem [#allocation4], %s573
        // Predicated region
        $region49: #{tpu_custom_call.1} parent=39 // pred_check
          %p575 = pneg %p187
        $region50: #{tpu_custom_call.1} parent=39 // pred_check_branch
          %577 = sbr.rel (%p575) target = $region52
        $region51: #{tpu_custom_call.1} parent=39 // pred_region
          %579 = vsyncadd %s571, 0
          %s580 = smul.addr %s32, 8
          %s581 = scalar_lea.hbm %s6, %s580
          %s583 = sshll.u32 %s574, 4
          %s584 = int_to_ptr.vmem [resolvable:$true] %s583
          %s585 = sshll.u32 %s581, 4
          %s586 = int_to_ptr.hbm [resolvable:$true] %s585
          %588 = dma.vmem_to_hbm [thread:$0]  %s584, 128, %s586, %s571
        $region52: #{tpu_custom_call.1} parent=39 // pred_fallthru
          _
      $region40: #{tpu_custom_call.1} parent=5 // pred_fallthru
        _
      %p589 = scmp.le.s32.totalorder 2, %s23
      // Predicated region
      $region53: #{tpu_custom_call.1} parent=5 // pred_check
        %p590 = pneg %p589
      $region54: #{tpu_custom_call.1} parent=5 // pred_check_branch
        %592 = sbr.rel (%p590) target = $region56
      $region55: #{tpu_custom_call.1} parent=5 // pred_region
        %s593 = ssub.s32 %s23, 2
        // Predicated region
        $region57: #{tpu_custom_call.1} parent=55 // pred_check
          %p594 = pneg %p193
        $region58: #{tpu_custom_call.1} parent=55 // pred_check_branch
          %596 = sbr.rel (%p594) target = $region60
        $region59: #{tpu_custom_call.1} parent=55 // pred_region
          %s597 = sand.u32 %s178, 1
          %s598 = scalar_lea.sflag [#allocation5], %s597
          %s599 = sand.u32 %s178, 1
          %s600 = smul.addr %s599, 8
          %s601 = scalar_lea.vmem [#allocation4], %s600
          %603 = dma.done %s598, 128
        $region60: #{tpu_custom_call.1} parent=55 // pred_fallthru
          _
      $region56: #{tpu_custom_call.1} parent=5 // pred_fallthru
        _
    $region6: #{tpu_custom_call.1} parent=1 // loop_footer
      %s27 = sadd.s32 1, %s23
    $region7: #{tpu_custom_call.1} parent=1 // loop_footer_branch
      %22 = sbr.rel target = $region3
    $region8: #{tpu_custom_call.1} parent=1 // loop_exit
      _
    %604 = vsyncpa [#allocation5], 1
    %s605 = scalar_lea.sflag [#allocation5], 1
    %606 = vsyncpa %s605, 1

</llo_original>
